<compile_context>
chip_gen: v5e
topology: v5e:2x2
jax: 0.10.0
libtpu: 0.0.40
codegen_flags: <defaults>
</compile_context>

<pallas_src>
import jax
import jax.numpy as jnp
from jax import lax
from jax.experimental import pallas as pl
from jax.experimental.pallas import tpu as pltpu

_LANE = 128


def _embed_controller_kernel(states_ref, mask_ref, w_ref, b_ref, out_ref):
    """Masked sum-pool -> MXU linear -> exact 1/denom scale -> sigmoid.

    states_ref: (S, H, TB)  native dtype (bf16 stays bf16 through the multiply)
    mask_ref:   (S, 1, TB)  float (0/1)
    w_ref:      (A, H)      PyTorch Linear weight layout [out, in]
    b_ref:      (A, 1)
    out_ref:    (A, TB)     f32, lane-dense (TB on lanes)
    """
    states = states_ref[...]                                  # (S, H, TB)
    mask = mask_ref[...]                                      # (S, 1, TB)

    # Masked sum over the sequence axis: S plain VPU multiply-adds over dense
    # (H, TB) vregs; product stays in the input dtype, accumulation in f32.
    masked = states * mask.astype(states.dtype)               # (S, H, TB)
    pooled_sum = jnp.sum(masked.astype(jnp.float32), axis=0)  # (H, TB) f32
    denom = jnp.sum(mask.astype(jnp.float32), axis=0)         # (1, TB)

    # Linear contraction over H as a single MXU op: W(A,H) @ pooled(H,TB).
    w = w_ref[...].astype(jnp.float32)                        # (A, H)
    value = lax.dot_general(
        w, pooled_sum,
        dimension_numbers=(((1,), (0,)), ((), ())),
        preferred_element_type=jnp.float32,
        precision=lax.Precision.HIGHEST,
    )                                                         # (A, TB)

    # pooled = masked_sum / denom  =>  value = (W @ masked_sum) / denom + b.
    # Exact division (only (A, TB) elements; cost is invisible, keeps parity
    # with the PyTorch reference).  Zero-mask rows divide by zero like PyTorch.
    value = value / denom + b_ref[...].astype(jnp.float32)

    out_ref[...] = jax.nn.sigmoid(value)


def _round_up(x, m):
    return ((x + m - 1) // m) * m


def _device_parallel_splits():
    """2-way batch split only on v7x (2 TensorCores/chip); serial chips get grid=1."""
    try:
        kind = jax.devices()[0].device_kind.lower()
        if "v7" in kind:
            return 2
    except Exception:
        pass
    return 1


def embed_controller_forward(states, mask, weight, bias, *, block_b=None, interpret=False):
    """Pallas-backed forward for the `model_structure is not None` branch.

    states: (B, S, H), mask: (B, S), weight: (A, H), bias: (A,).
    Returns sigmoid(masked_mean_pool(states, mask) @ weight.T + bias) as f32 (B, A).
    """
    B, S, H = states.shape
    A = weight.shape[0]

    splits = _device_parallel_splits()

    if block_b is None:
        if B <= max(256, splits * _LANE):
            # Single full block; B itself satisfies the (8,128) rule (equals full dim).
            block_b = B
        else:
            # VMEM guardrail: double-buffered states+mask bytes per block row.
            # Budget is conservative (6 MiB) so it fits v5e's 16 MiB scoped-VMEM
            # default and leaves headroom on v7x's 64 MiB physical VMEM per TC.
            per_row = 2 * (S * H * states.dtype.itemsize + S * mask.dtype.itemsize)
            budget = 6 * 1024 * 1024
            cap = max(_LANE, (budget // per_row) // _LANE * _LANE)
            # Prefer as few, as large blocks as possible; >=`splits` steps on v7x.
            target = _round_up(pl.cdiv(B, splits), _LANE)
            block_b = min(cap, target)

    # Ragged batch: pad up to a multiple of block_b (never collapse to one huge block).
    B_pad = _round_up(B, block_b)
    if B_pad != B:
        pad = B_pad - B
        states = jnp.pad(states, ((0, pad), (0, 0), (0, 0)))
        # Pad mask rows with 1s so padded rows stay finite (they are discarded below).
        mask = jnp.pad(mask, ((0, pad), (0, 0)), constant_values=1.0)

    # Wrapper-side layout plumbing (cheap): batch-on-lanes.
    states_t = jnp.transpose(states, (1, 2, 0))        # (S, H, B_pad)
    mask_t = jnp.transpose(mask, (1, 0))[:, None, :]   # (S, 1, B_pad)
    bias2d = bias.reshape(A, 1)                        # (A, 1)

    grid = (B_pad // block_b,)

    out = pl.pallas_call(
        _embed_controller_kernel,
        out_shape=jax.ShapeDtypeStruct((A, B_pad), jnp.float32),
        grid=grid,
        in_specs=[
            pl.BlockSpec((S, H, block_b), lambda i: (0, 0, i)),  # states (batch on lanes)
            pl.BlockSpec((S, 1, block_b), lambda i: (0, 0, i)),  # mask
            pl.BlockSpec((A, H), lambda i: (0, 0)),              # weight (untiled)
            pl.BlockSpec((A, 1), lambda i: (0, 0)),              # bias   (untiled)
        ],
        out_specs=pl.BlockSpec((A, block_b), lambda i: (0, i)),  # lane-dense output
        compiler_params=pltpu.CompilerParams(
            dimension_semantics=("parallel",)),  # v7x: one big block per TensorCore
        interpret=interpret,
    )(states_t, mask_t, weight, bias2d)

    # Tiny (A, B) -> (B, A) transpose + un-pad in the wrapper.
    return out[:, :B].T


class EmbedControllerJAX:
    """Mirrors EmbedController.__init__ / forward."""

    def __init__(self, num_actions, model_structure=None, state_size=20):
        self.num_actions = num_actions
        self.model_structure = model_structure
        self.state_size = state_size
        if self.model_structure is None:
            # nn.Parameter(torch.zeros(num_actions))
            self.selector = jnp.zeros((num_actions,), dtype=jnp.float32)
        else:
            # nn.Linear(state_size, num_actions), zero-initialized per __init__
            self.weight = jnp.zeros((num_actions, state_size), dtype=jnp.float32)
            self.bias = jnp.zeros((num_actions,), dtype=jnp.float32)

    def forward(self, states=None, mask=None):
        if self.model_structure is None:
            # Pure parameter pass-through + sigmoid; no reduction/matmul hot path,
            # so no kernel boundary is worth paying here.
            return jax.nn.sigmoid(self.selector)
        return embed_controller_forward(states, mask, self.weight, self.bias)

    # TODO(synk): sample() (Bernoulli rejection sampling with previous_selection
    # state) is host-side control flow and is not part of forward(); not translated.


def _reference_forward(states, mask, weight, bias):
    """Plain-JAX reference matching the PyTorch math (HIGHEST precision dot)."""
    states = states.astype(jnp.float32)
    mask = mask.astype(jnp.float32)
    pooled = (states * mask[..., None]).sum(-2) / mask.sum(-1, keepdims=True)
    value = jnp.dot(pooled, weight.T, precision=lax.Precision.HIGHEST) + bias
    return jax.nn.sigmoid(value)


if __name__ == "__main__":
    key = jax.random.PRNGKey(0)
    k_states, k_mask, k_w, k_b, k_big = jax.random.split(key, 5)

    # Shapes implied by the forward: batch=2, seq=8, state_size=20, actions=6
    B, S, H, A = 2, 8, 20, 6

    states = jax.random.normal(k_states, (B, S, H), dtype=jnp.float32)
    mask = (jax.random.uniform(k_mask, (B, S)) > 0.3).astype(jnp.float32)
    mask = mask.at[:, 0].set(1.0)  # avoid divide-by-zero rows

    # 1) Faithful-to-__init__ run (zero-initialized Linear -> output is all 0.5)
    ctrl = EmbedControllerJAX(num_actions=A, model_structure="mlp", state_size=H)
    out_zero = ctrl.forward(states, mask)
    jax.block_until_ready(out_zero)
    assert out_zero.shape == (B, A)
    assert jnp.allclose(out_zero, 0.5 * jnp.ones((B, A)), atol=1e-6), "zero-init mismatch"

    # 2) Non-trivial weights to exercise the kernel math (exact division -> tight tol).
    w = jax.random.normal(k_w, (A, H), dtype=jnp.float32) * 0.1
    b = jax.random.normal(k_b, (A,), dtype=jnp.float32) * 0.1
    out_rand = embed_controller_forward(states, mask, w, b)
    jax.block_until_ready(out_rand)
    ref_rand = _reference_forward(states, mask, w, b)
    assert jnp.allclose(out_rand, ref_rand, rtol=1e-5, atol=1e-5), "random-weight mismatch"

    # 3) Batched, lane-dense path: bf16 activations, batch padded to 128-lane blocks,
    #    grid=1 on v5e/v6e and grid=2 on v7x (one big block per TensorCore).
    Bb = 500  # deliberately ragged to exercise cdiv + padding
    kb1, kb2 = jax.random.split(k_big)
    states_big = jax.random.normal(kb1, (Bb, S, H), dtype=jnp.bfloat16)
    mask_big = (jax.random.uniform(kb2, (Bb, S)) > 0.3).astype(jnp.float32)
    mask_big = mask_big.at[:, 0].set(1.0)
    out_big = embed_controller_forward(states_big, mask_big, w, b)
    jax.block_until_ready(out_big)
    assert out_big.shape == (Bb, A)
    ref_big = _reference_forward(states_big, mask_big, w, b)
    assert jnp.allclose(out_big, ref_big, rtol=1e-4, atol=1e-4), "batched/bf16 mismatch"

    # 4) model_structure=None branch (trivial sigmoid of the parameter; plain JAX)
    ctrl_none = EmbedControllerJAX(num_actions=A, model_structure=None)
    out_none = ctrl_none.forward()
    jax.block_until_ready(out_none)
    assert jnp.allclose(out_none, 0.5 * jnp.ones((A,))), "param-branch mismatch"

    print("KERNEL_OK")
</pallas_src>

<mosaic_0001>
module attributes {stable_mosaic.version = 11 : i64} {
  func.func @_embed_controller_kernel(%arg0: i32, %arg1: memref<8x20x2xf32, #tpu.memory_space<vmem>>, %arg2: memref<8x1x2xf32, #tpu.memory_space<vmem>>, %arg3: memref<6x20xf32, #tpu.memory_space<vmem>>, %arg4: memref<6x1xf32, #tpu.memory_space<vmem>>, %arg5: memref<6x2xf32, #tpu.memory_space<vmem>>) attributes {dimension_semantics = [#tpu.dimension_semantics<parallel>], iteration_bounds = array<i64: 1>, scalar_prefetch = 0 : i64, scratch_operands = 0 : i64, tpu.core_type = #tpu.core_type<tc>, window_params = [{transform_indices = @transform_0, window_bounds = array<i64: 8, 20, 2>}, {transform_indices = @transform_1, window_bounds = array<i64: 8, 1, 2>}, {pipeline_mode = #tpu.pipeline_mode<synchronous>, transform_indices = @transform_2, window_bounds = array<i64: 6, 20>}, {pipeline_mode = #tpu.pipeline_mode<synchronous>, transform_indices = @transform_3, window_bounds = array<i64: 6, 1>}, {transform_indices = @transform_4, window_bounds = array<i64: 6, 2>}]} {
    %c0 = arith.constant 0 : index
    %c0_0 = arith.constant 0 : index
    %c0_1 = arith.constant 0 : index
    %0 = vector.load %arg1[%c0, %c0_0, %c0_1] : memref<8x20x2xf32, #tpu.memory_space<vmem>>, vector<8x20x2xf32>
    %c0_2 = arith.constant 0 : index
    %c0_3 = arith.constant 0 : index
    %c0_4 = arith.constant 0 : index
    %1 = vector.load %arg2[%c0_2, %c0_3, %c0_4] : memref<8x1x2xf32, #tpu.memory_space<vmem>>, vector<8x1x2xf32>
    %2 = vector.broadcast %1 : vector<8x1x2xf32> to vector<8x20x2xf32>
    %3 = arith.mulf %0, %2 : vector<8x20x2xf32>
    %cst = arith.constant dense<0.000000e+00> : vector<20x2xf32>
    %4 = vector.multi_reduction <add>, %3, %cst [0] : vector<8x20x2xf32> to vector<20x2xf32>
    %cst_5 = arith.constant dense<0.000000e+00> : vector<1x2xf32>
    %5 = vector.multi_reduction <add>, %1, %cst_5 [0] : vector<8x1x2xf32> to vector<1x2xf32>
    %c0_6 = arith.constant 0 : index
    %c0_7 = arith.constant 0 : index
    %6 = vector.load %arg3[%c0_6, %c0_7] : memref<6x20xf32, #tpu.memory_space<vmem>>, vector<6x20xf32>
    %cst_8 = arith.constant dense<0.000000e+00> : vector<6x2xf32>
    %7 = tpu.matmul %6, %4, %cst_8 {dimension_numbers = #tpu.dot_dimension_numbers<[1], [0], [0], [1], [0, 0, 1, 1], [], []>, precision = #tpu.contract_precision<fp32>} : vector<6x20xf32>, vector<20x2xf32>, vector<6x2xf32> -> vector<6x2xf32>
    %8 = vector.broadcast %5 : vector<1x2xf32> to vector<6x2xf32>
    %9 = arith.divf %7, %8 : vector<6x2xf32>
    %c0_9 = arith.constant 0 : index
    %c0_10 = arith.constant 0 : index
    %10 = vector.load %arg4[%c0_9, %c0_10] : memref<6x1xf32, #tpu.memory_space<vmem>>, vector<6x1xf32>
    %11 = vector.broadcast %10 : vector<6x1xf32> to vector<6x2xf32>
    %12 = arith.addf %9, %11 : vector<6x2xf32>
    %13 = arith.negf %12 : vector<6x2xf32>
    %14 = math.exp %13 : vector<6x2xf32>
    %cst_11 = arith.constant 1.000000e+00 : f32
    %15 = vector.broadcast %cst_11 : f32 to vector<6x2xf32>
    %16 = arith.addf %15, %14 : vector<6x2xf32>
    %17 = arith.divf %15, %16 : vector<6x2xf32>
    %c0_12 = arith.constant 0 : index
    %c0_13 = arith.constant 0 : index
    %18 = vector.load %arg5[%c0_12, %c0_13] : memref<6x2xf32, #tpu.memory_space<vmem>>, vector<6x2xf32>
    tpu.vector_store %arg5[%c0_12, %c0_13], %17 {strides = array<i32>} : memref<6x2xf32, #tpu.memory_space<vmem>>, vector<6x2xf32>,
    return
  }
  func.func @transform_0(%arg0: i32) -> (i32, i32, i32) {
    %c0_i32 = arith.constant 0 : i32
    %c0_i32_0 = arith.constant 0 : i32
    %c0_i32_1 = arith.constant 0 : i32
    return %c0_i32, %c0_i32_0, %arg0 : i32, i32, i32
  }
  func.func @transform_1(%arg0: i32) -> (i32, i32, i32) {
    %c0_i32 = arith.constant 0 : i32
    %c0_i32_0 = arith.constant 0 : i32
    %c0_i32_1 = arith.constant 0 : i32
    return %c0_i32, %c0_i32_0, %arg0 : i32, i32, i32
  }
  func.func @transform_2(%arg0: i32) -> (i32, i32) {
    %c0_i32 = arith.constant 0 : i32
    %c0_i32_0 = arith.constant 0 : i32
    %c0_i32_1 = arith.constant 0 : i32
    return %c0_i32, %c0_i32_0 : i32, i32
  }
  func.func @transform_3(%arg0: i32) -> (i32, i32) {
    %c0_i32 = arith.constant 0 : i32
    %c0_i32_0 = arith.constant 0 : i32
    %c0_i32_1 = arith.constant 0 : i32
    return %c0_i32, %c0_i32_0 : i32, i32
  }
  func.func @transform_4(%arg0: i32) -> (i32, i32) {
    %c0_i32 = arith.constant 0 : i32
    %c0_i32_0 = arith.constant 0 : i32
    return %c0_i32, %arg0 : i32, i32
  }
}

</mosaic_0001>

<llo_original>
// kernel: tpu_custom_call.1
$region0: #{tpu_custom_call.1}
  #allocation0 [shape = 'u32[]', space=smem, size = 0x4, offset = 0x4, fixed_abs, tag = 'smem constant byte address 0x4 - core index']
  #allocation1 [shape = 'u32[72,128]{1,0:T(1,128)}', space=vmem, size = 0x9000, scoped, tag = 'internal scratch']
  %s0 = inlined_call_operand.vmem [shape: f32[8,20,2], index: 0, kind: input, shape index: {}]
  %s1 = inlined_call_operand.vmem [shape: f32[8,1,2], index: 1, kind: input, shape index: {}]
  %s2 = inlined_call_operand.vmem [shape: f32[6,20], index: 2, kind: input, shape index: {}]
  %s3 = inlined_call_operand.vmem [shape: f32[6,1], index: 3, kind: input, shape index: {}]
  %s4 = inlined_call_operand.vmem [shape: f32[6,2], index: 4, kind: output, shape index: {}]
  %s5 = sld [smem:[#allocation0]]
  $region26: #{tpu_custom_call.1} parent=0
    _
  %s7 = ssub.s32 1, %s5
  %s8 = scalar_select 0, %s7, %s5
  // Predicated region
  $region2: #{tpu_custom_call.1} parent=0 // pred_check
    _
  $region3: #{tpu_custom_call.1} parent=0 // pred_check_branch
    %10 = sbr.rel (0) target = $region5
  $region4: #{tpu_custom_call.1} parent=0 // pred_region
    _
  $region5: #{tpu_custom_call.1} parent=0 // pred_fallthru
    _
  // Predicated region
  $region6: #{tpu_custom_call.1} parent=0 // pred_check
    _
  $region7: #{tpu_custom_call.1} parent=0 // pred_check_branch
    %12 = sbr.rel (0) target = $region9
  $region8: #{tpu_custom_call.1} parent=0 // pred_region
    _
  $region9: #{tpu_custom_call.1} parent=0 // pred_fallthru
    _
  // Predicated region
  $region10: #{tpu_custom_call.1} parent=0 // pred_check
    _
  $region11: #{tpu_custom_call.1} parent=0 // pred_check_branch
    %14 = sbr.rel (0) target = $region13
  $region12: #{tpu_custom_call.1} parent=0 // pred_region
    _
  $region13: #{tpu_custom_call.1} parent=0 // pred_fallthru
    _
  // Predicated region
  $region14: #{tpu_custom_call.1} parent=0 // pred_check
    _
  $region15: #{tpu_custom_call.1} parent=0 // pred_check_branch
    %16 = sbr.rel (0) target = $region17
  $region16: #{tpu_custom_call.1} parent=0 // pred_region
    _
  $region17: #{tpu_custom_call.1} parent=0 // pred_fallthru
    _
  %v17 = vld [vmem:[%s0] sm:$0xff]
  %v18 = vld [vmem:[%s0 + $0x8] sm:$0xff]
  %v19 = vld [vmem:[%s0 + $0x10] sm:$0xf]
  %v20 = vld [vmem:[%s0 + $0x18] sm:$0xff]
  %v21 = vld [vmem:[%s0 + $0x20] sm:$0xff]
  %v22 = vld [vmem:[%s0 + $0x28] sm:$0xf]
  %v23 = vld [vmem:[%s0 + $0x30] sm:$0xff]
  %v24 = vld [vmem:[%s0 + $0x38] sm:$0xff]
  %v25 = vld [vmem:[%s0 + $0x40] sm:$0xf]
  %v26 = vld [vmem:[%s0 + $0x48] sm:$0xff]
  %v27 = vld [vmem:[%s0 + $0x50] sm:$0xff]
  %v28 = vld [vmem:[%s0 + $0x58] sm:$0xf]
  %v29 = vld [vmem:[%s0 + $0x60] sm:$0xff]
  %v30 = vld [vmem:[%s0 + $0x68] sm:$0xff]
  %v31 = vld [vmem:[%s0 + $0x70] sm:$0xf]
  %v32 = vld [vmem:[%s0 + $0x78] sm:$0xff]
  %v33 = vld [vmem:[%s0 + $0x80] sm:$0xff]
  %v34 = vld [vmem:[%s0 + $0x88] sm:$0xf]
  %v35 = vld [vmem:[%s0 + $0x90] sm:$0xff]
  %v36 = vld [vmem:[%s0 + $0x98] sm:$0xff]
  %v37 = vld [vmem:[%s0 + $0xa0] sm:$0xf]
  %v38 = vld [vmem:[%s0 + $0xa8] sm:$0xff]
  %v39 = vld [vmem:[%s0 + $0xb0] sm:$0xff]
  %v40 = vld [vmem:[%s0 + $0xb8] sm:$0xf]
  %v41 = vld [vmem:[%s1] sm:$0x1]
  %v42 = vld [vmem:[%s1 + $0x1] sm:$0x1]
  %v43 = vld [vmem:[%s1 + $0x2] sm:$0x1]
  %v44 = vld [vmem:[%s1 + $0x3] sm:$0x1]
  %v45 = vld [vmem:[%s1 + $0x4] sm:$0x1]
  %v46 = vld [vmem:[%s1 + $0x5] sm:$0x1]
  %v47 = vld [vmem:[%s1 + $0x6] sm:$0x1]
  %v48 = vld [vmem:[%s1 + $0x7] sm:$0x1]
  %v57 = vperm.slane %v41, 0
  %v58 = vperm.slane %v42, 0
  %v59 = vperm.slane %v43, 0
  %v60 = vperm.slane %v44, 0
  %v61 = vperm.slane %v45, 0
  %v62 = vperm.slane %v46, 0
  %v63 = vperm.slane %v47, 0
  %v64 = vperm.slane %v48, 0
  %v73 = vmul.f32 %v17, %v57
  %v74 = vmul.f32 %v18, %v57
  %v75 = vmul.f32 %v19, %v57
  %v76 = vmul.f32 %v20, %v58
  %v77 = vmul.f32 %v21, %v58
  %v78 = vmul.f32 %v22, %v58
  %v79 = vmul.f32 %v23, %v59
  %v80 = vmul.f32 %v24, %v59
  %v81 = vmul.f32 %v25, %v59
  %v82 = vmul.f32 %v26, %v60
  %v83 = vmul.f32 %v27, %v60
  %v84 = vmul.f32 %v28, %v60
  %v85 = vmul.f32 %v29, %v61
  %v86 = vmul.f32 %v30, %v61
  %v87 = vmul.f32 %v31, %v61
  %v88 = vmul.f32 %v32, %v62
  %v89 = vmul.f32 %v33, %v62
  %v90 = vmul.f32 %v34, %v62
  %v91 = vmul.f32 %v35, %v63
  %v92 = vmul.f32 %v36, %v63
  %v93 = vmul.f32 %v37, %v63
  %v94 = vmul.f32 %v38, %v64
  %v95 = vmul.f32 %v39, %v64
  %v96 = vmul.f32 %v40, %v64
  %vm97 = vcmask 15360
  %v98 = vsel %vm97, %v73, 0.0
  %v99 = vsel %vm97, %v76, 0.0
  %v100 = vadd.f32 %v98, %v99
  %v101 = vsel %vm97, %v79, 0.0
  %v102 = vadd.f32 %v100, %v101
  %v103 = vsel %vm97, %v82, 0.0
  %v104 = vadd.f32 %v102, %v103
  %v105 = vsel %vm97, %v85, 0.0
  %v106 = vadd.f32 %v104, %v105
  %v107 = vsel %vm97, %v88, 0.0
  %v108 = vadd.f32 %v106, %v107
  %v109 = vsel %vm97, %v91, 0.0
  %v110 = vadd.f32 %v108, %v109
  %v111 = vsel %vm97, %v94, 0.0
  %v112 = vadd.f32 %v110, %v111
  %v113 = vsel %vm97, %v74, 0.0
  %v114 = vsel %vm97, %v77, 0.0
  %v115 = vadd.f32 %v113, %v114
  %v116 = vsel %vm97, %v80, 0.0
  %v117 = vadd.f32 %v115, %v116
  %v118 = vsel %vm97, %v83, 0.0
  %v119 = vadd.f32 %v117, %v118
  %v120 = vsel %vm97, %v86, 0.0
  %v121 = vadd.f32 %v119, %v120
  %v122 = vsel %vm97, %v89, 0.0
  %v123 = vadd.f32 %v121, %v122
  %v124 = vsel %vm97, %v92, 0.0
  %v125 = vadd.f32 %v123, %v124
  %v126 = vsel %vm97, %v95, 0.0
  %v127 = vadd.f32 %v125, %v126
  %vm128 = vcmask 11264
  %v129 = vsel %vm128, %v75, 0.0
  %v130 = vsel %vm128, %v78, 0.0
  %v131 = vadd.f32 %v129, %v130
  %v132 = vsel %vm128, %v81, 0.0
  %v133 = vadd.f32 %v131, %v132
  %v134 = vsel %vm128, %v84, 0.0
  %v135 = vadd.f32 %v133, %v134
  %v136 = vsel %vm128, %v87, 0.0
  %v137 = vadd.f32 %v135, %v136
  %v138 = vsel %vm128, %v90, 0.0
  %v139 = vadd.f32 %v137, %v138
  %v140 = vsel %vm128, %v93, 0.0
  %v141 = vadd.f32 %v139, %v140
  %v142 = vsel %vm128, %v96, 0.0
  %v143 = vadd.f32 %v141, %v142
  %vm144 = vcmask 8192
  %v145 = vsel %vm144, %v41, 0.0
  %v146 = vsel %vm144, %v42, 0.0
  %v147 = vadd.f32 %v145, %v146
  %v148 = vsel %vm144, %v43, 0.0
  %v149 = vadd.f32 %v147, %v148
  %v150 = vsel %vm144, %v44, 0.0
  %v151 = vadd.f32 %v149, %v150
  %v152 = vsel %vm144, %v45, 0.0
  %v153 = vadd.f32 %v151, %v152
  %v154 = vsel %vm144, %v46, 0.0
  %v155 = vadd.f32 %v153, %v154
  %v156 = vsel %vm144, %v47, 0.0
  %v157 = vadd.f32 %v155, %v156
  %v158 = vsel %vm144, %v48, 0.0
  %v159 = vadd.f32 %v157, %v158
  %v160 = vld [vmem:[%s2] sm:$0x3f]
  %vm161 = vcmask 162816
  %v163 = vsel %vm161, %v160, 0
  %vm165 = vcmask 1043456
  %v167 = vsel %vm165, %v143, 0
  %169 = vmatpush.msra.mxu0 0.0
  %170 = vmatpush.msra.mxu0 0.0
  %171 = vmatpush.msra.mxu0 0.0
  %172 = vmatpush.msra.mxu0 0.0
  %173 = vmatpush.msra.mxu0 0.0
  %174 = vmatpush.msra.mxu0 0.0
  %175 = vmatpush.msra.mxu0 0.0
  %176 = vmatpush.msra.mxu0 0.0
  %177 = vmatpush.msra.mxu0 0.0
  %178 = vmatpush.msra.mxu0 0.0
  %179 = vmatpush.msra.mxu0 0.0
  %180 = vmatpush.msra.mxu0 0.0
  %181 = vmatpush.msra.mxu0 0.0
  %v182 = vand.u32 %v167, 4294901760
  %183 = vmatpush.msra.mxu0 %v182
  %v184 = vand.u32 %v127, 4294901760
  %185 = vmatpush.msra.mxu0 %v184
  %v186 = vand.u32 %v112, 4294901760
  %187 = vmatpush.msra.mxu0 %v186
  %v188 = vand.u32 %v163, 4294901760
  %v189 = vsub.f32 %v163, %v188
  %v190 = vand.u32 %v189, 4294901760
  %v191 = vsub.f32 %v189, %v190
  %v192 = vand.u32 %v191, 4294901760
  %193 = vmatmul.f32.gmra.mxu0 %v192
  %v194 = vpop.f32.mrf.mxu0
  %v195 = vadd.f32 0.0, %v194
  %196 = vdwg.mxu0
  %197 = vmatpush.msra.mxu0 0.0
  %198 = vmatpush.msra.mxu0 0.0
  %199 = vmatpush.msra.mxu0 0.0
  %200 = vmatpush.msra.mxu0 0.0
  %201 = vmatpush.msra.mxu0 0.0
  %202 = vmatpush.msra.mxu0 0.0
  %203 = vmatpush.msra.mxu0 0.0
  %204 = vmatpush.msra.mxu0 0.0
  %205 = vmatpush.msra.mxu0 0.0
  %206 = vmatpush.msra.mxu0 0.0
  %207 = vmatpush.msra.mxu0 0.0
  %208 = vmatpush.msra.mxu0 0.0
  %209 = vmatpush.msra.mxu0 0.0
  %v210 = vand.u32 %v167, 4294901760
  %v211 = vsub.f32 %v167, %v210
  %v212 = vand.u32 %v211, 4294901760
  %v213 = vsub.f32 %v211, %v212
  %v214 = vand.u32 %v213, 4294901760
  %215 = vmatpush.msra.mxu0 %v214
  %v216 = vand.u32 %v127, 4294901760
  %v217 = vsub.f32 %v127, %v216
  %v218 = vand.u32 %v217, 4294901760
  %v219 = vsub.f32 %v217, %v218
  %v220 = vand.u32 %v219, 4294901760
  %221 = vmatpush.msra.mxu0 %v220
  %v222 = vand.u32 %v112, 4294901760
  %v223 = vsub.f32 %v112, %v222
  %v224 = vand.u32 %v223, 4294901760
  %v225 = vsub.f32 %v223, %v224
  %v226 = vand.u32 %v225, 4294901760
  %227 = vmatpush.msra.mxu0 %v226
  %v228 = vand.u32 %v163, 4294901760
  %229 = vmatmul.f32.gmra.mxu0 %v228
  %v230 = vpop.f32.mrf.mxu0
  %v231 = vadd.f32 %v195, %v230
  %232 = vdwg.mxu0
  %233 = vmatpush.msra.mxu0 0.0
  %234 = vmatpush.msra.mxu0 0.0
  %235 = vmatpush.msra.mxu0 0.0
  %236 = vmatpush.msra.mxu0 0.0
  %237 = vmatpush.msra.mxu0 0.0
  %238 = vmatpush.msra.mxu0 0.0
  %239 = vmatpush.msra.mxu0 0.0
  %240 = vmatpush.msra.mxu0 0.0
  %241 = vmatpush.msra.mxu0 0.0
  %242 = vmatpush.msra.mxu0 0.0
  %243 = vmatpush.msra.mxu0 0.0
  %244 = vmatpush.msra.mxu0 0.0
  %245 = vmatpush.msra.mxu0 0.0
  %v246 = vand.u32 %v167, 4294901760
  %v247 = vsub.f32 %v167, %v246
  %248 = vmatpush.msra.mxu0 %v247
  %v249 = vand.u32 %v127, 4294901760
  %v250 = vsub.f32 %v127, %v249
  %251 = vmatpush.msra.mxu0 %v250
  %v252 = vand.u32 %v112, 4294901760
  %v253 = vsub.f32 %v112, %v252
  %254 = vmatpush.msra.mxu0 %v253
  %v255 = vand.u32 %v163, 4294901760
  %v256 = vsub.f32 %v163, %v255
  %257 = vmatmul.f32.gmra.mxu0 %v256
  %v258 = vpop.f32.mrf.mxu0
  %v259 = vadd.f32 %v231, %v258
  %260 = vdwg.mxu0
  %261 = vmatpush.msra.mxu0 0.0
  %262 = vmatpush.msra.mxu0 0.0
  %263 = vmatpush.msra.mxu0 0.0
  %264 = vmatpush.msra.mxu0 0.0
  %265 = vmatpush.msra.mxu0 0.0
  %266 = vmatpush.msra.mxu0 0.0
  %267 = vmatpush.msra.mxu0 0.0
  %268 = vmatpush.msra.mxu0 0.0
  %269 = vmatpush.msra.mxu0 0.0
  %270 = vmatpush.msra.mxu0 0.0
  %271 = vmatpush.msra.mxu0 0.0
  %272 = vmatpush.msra.mxu0 0.0
  %273 = vmatpush.msra.mxu0 0.0
  %v274 = vand.u32 %v167, 4294901760
  %275 = vmatpush.msra.mxu0 %v274
  %v276 = vand.u32 %v127, 4294901760
  %277 = vmatpush.msra.mxu0 %v276
  %v278 = vand.u32 %v112, 4294901760
  %279 = vmatpush.msra.mxu0 %v278
  %v280 = vand.u32 %v163, 4294901760
  %v281 = vsub.f32 %v163, %v280
  %v282 = vand.u32 %v281, 4294901760
  %283 = vmatmul.f32.gmra.mxu0 %v282
  %v284 = vpop.f32.mrf.mxu0
  %v285 = vadd.f32 %v259, %v284
  %286 = vdwg.mxu0
  %287 = vmatpush.msra.mxu0 0.0
  %288 = vmatpush.msra.mxu0 0.0
  %289 = vmatpush.msra.mxu0 0.0
  %290 = vmatpush.msra.mxu0 0.0
  %291 = vmatpush.msra.mxu0 0.0
  %292 = vmatpush.msra.mxu0 0.0
  %293 = vmatpush.msra.mxu0 0.0
  %294 = vmatpush.msra.mxu0 0.0
  %295 = vmatpush.msra.mxu0 0.0
  %296 = vmatpush.msra.mxu0 0.0
  %297 = vmatpush.msra.mxu0 0.0
  %298 = vmatpush.msra.mxu0 0.0
  %299 = vmatpush.msra.mxu0 0.0
  %v300 = vand.u32 %v167, 4294901760
  %v301 = vsub.f32 %v167, %v300
  %v302 = vand.u32 %v301, 4294901760
  %303 = vmatpush.msra.mxu0 %v302
  %v304 = vand.u32 %v127, 4294901760
  %v305 = vsub.f32 %v127, %v304
  %v306 = vand.u32 %v305, 4294901760
  %307 = vmatpush.msra.mxu0 %v306
  %v308 = vand.u32 %v112, 4294901760
  %v309 = vsub.f32 %v112, %v308
  %v310 = vand.u32 %v309, 4294901760
  %311 = vmatpush.msra.mxu0 %v310
  %v312 = vand.u32 %v163, 4294901760
  %313 = vmatmul.f32.gmra.mxu0 %v312
  %v314 = vpop.f32.mrf.mxu0
  %v315 = vadd.f32 %v285, %v314
  %316 = vdwg.mxu0
  %317 = vmatpush.msra.mxu0 0.0
  %318 = vmatpush.msra.mxu0 0.0
  %319 = vmatpush.msra.mxu0 0.0
  %320 = vmatpush.msra.mxu0 0.0
  %321 = vmatpush.msra.mxu0 0.0
  %322 = vmatpush.msra.mxu0 0.0
  %323 = vmatpush.msra.mxu0 0.0
  %324 = vmatpush.msra.mxu0 0.0
  %325 = vmatpush.msra.mxu0 0.0
  %326 = vmatpush.msra.mxu0 0.0
  %327 = vmatpush.msra.mxu0 0.0
  %328 = vmatpush.msra.mxu0 0.0
  %329 = vmatpush.msra.mxu0 0.0
  %v330 = vand.u32 %v167, 4294901760
  %331 = vmatpush.msra.mxu0 %v330
  %v332 = vand.u32 %v127, 4294901760
  %333 = vmatpush.msra.mxu0 %v332
  %v334 = vand.u32 %v112, 4294901760
  %335 = vmatpush.msra.mxu0 %v334
  %v336 = vand.u32 %v163, 4294901760
  %337 = vmatmul.f32.gmra.mxu0 %v336
  %v338 = vpop.f32.mrf.mxu0
  %v339 = vadd.f32 %v315, %v338
  %340 = vdwg.mxu0
  %v341 = vperm.slane %v159, 0
  %v342 = vrcp.pop %v341
  %v343 = vmul.f32 %v341, %v342
  %v344 = vsub.f32 1.0, %v343
  %v345 = vmul.f32 %v342, %v344
  %v346 = vadd.f32 %v342, %v345
  %vm347 = vweird.f32 %v341
  %vm348 = vweird.f32 %v342
  %vm349 = vmor %vm347, %vm348
  %v350 = vsel %vm349, %v342, %v346
  %v351 = vand.u32 2147483647, %v341
  %vm352 = vcmp.eq.f32.partialorder %v351, 8.507059e+37
  %v353 = vand.u32 %v341, 2147483648
  %v354 = vor.u32 1.1754944e-38, %v353
  %v355 = vsel %vm352, %v354, %v350
  %v356 = vmul.f32 %v339, %v355
  %v357 = vld [vmem:[%s3] sm:$0x3f]
  %359 = vset.pattern.permute.xlu0 0
  %360 = vperm.xlu0 %359, %v357
  %v361 = vpop.permute.xlu0 %360
  %v363 = vadd.f32 %v356, %v361
  %v364 = vxor.u32 %v363, 2147483648
  %v365 = vmul.f32 %v364, 1.442695
  %v366 = vpow.pop %v365
  %v367 = vadd.f32 %v366, 1.0
  %v368 = vrcp.pop %v367
  %v369 = vmul.f32 %v367, %v368
  %v370 = vsub.f32 1.0, %v369
  %v371 = vmul.f32 %v368, %v370
  %v372 = vadd.f32 %v368, %v371
  %vm373 = vweird.f32 %v367
  %vm374 = vweird.f32 %v368
  %vm375 = vmor %vm373, %vm374
  %v376 = vsel %vm375, %v368, %v372
  %v377 = vand.u32 2147483647, %v367
  %vm378 = vcmp.eq.f32.partialorder %v377, 8.507059e+37
  %v379 = vand.u32 %v367, 2147483648
  %v380 = vor.u32 1.1754944e-38, %v379
  %v381 = vsel %vm378, %v380, %v376
  %v382 = vmul.f32 1.0, %v381
  %vm383 = vcmask 13312
  %384 = vst.msk [vmem:[%s4] sm:$0x3f] %vm383, %v382
  // Predicated region
  $region18: #{tpu_custom_call.1} parent=0 // pred_check
    _
  $region19: #{tpu_custom_call.1} parent=0 // pred_check_branch
    %386 = sbr.rel (0) target = $region21
  $region20: #{tpu_custom_call.1} parent=0 // pred_region
    _
  $region21: #{tpu_custom_call.1} parent=0 // pred_fallthru
    _
  // Predicated region
  $region22: #{tpu_custom_call.1} parent=0 // pred_check
    _
  $region23: #{tpu_custom_call.1} parent=0 // pred_check_branch
    %388 = sbr.rel (0) target = $region25
  $region24: #{tpu_custom_call.1} parent=0 // pred_region
    _
  $region25: #{tpu_custom_call.1} parent=0 // pred_fallthru
    _

</llo_original>
